<compile_context>
chip_gen: v5e
topology: v5e:2x2
jax: 0.10.0
libtpu: 0.0.40
codegen_flags: <defaults>
</compile_context>

<pallas_src>
import jax
import jax.numpy as jnp
from jax.experimental import pallas as pl
from jax.experimental.pallas import tpu as pltpu


def _round_up(x, m):
    return (x + m - 1) // m * m


# ----------------------------------------------------------------------------
# Pallas kernel: one (tm, tn) output tile, accumulated over the K grid axis.
# ----------------------------------------------------------------------------
def _td_linear_kernel(x_ref, w_ref, b_ref, o_ref, acc_ref):
    # x_ref: (tm, tk)  w_ref: (tk, tn)  b_ref: (1, tn)
    # o_ref: (tm, tn)  acc_ref: (tm, tn) f32 scratch
    k = pl.program_id(2)

    @pl.when(k == 0)
    def _():
        acc_ref[...] = jnp.zeros_like(acc_ref)

    acc_ref[...] += jnp.dot(x_ref[...], w_ref[...],
                            preferred_element_type=jnp.float32)

    @pl.when(k == pl.num_programs(2) - 1)
    def _():
        o_ref[...] = (acc_ref[...]
                      + b_ref[...].astype(jnp.float32)).astype(o_ref.dtype)


# ----------------------------------------------------------------------------
# y = x2d @ w + b via pallas_call.  x2d: (M, K), w: (K, N), b: (N,)
# ----------------------------------------------------------------------------
def _linear_pallas(x2d, w, b, *, tile_m=512, tile_n=256, tile_k=512):
    M, K = x2d.shape
    Kw, N = w.shape
    assert K == Kw, (K, Kw)
    dtype = x2d.dtype
    itemsize = jnp.dtype(dtype).itemsize

    # Sublane alignment for the M (second-to-last) axis.
    m_align = 8 if itemsize >= 4 else (16 if itemsize == 2 else 32)

    # --- choose padded sizes + tile sizes (tiles evenly divide padded dims) --
    if M <= tile_m:
        M_pad = _round_up(M, m_align)
        tm = M_pad
    else:
        tm = tile_m
        M_pad = _round_up(M, tm)

    if N <= tile_n:
        N_pad = _round_up(N, 128)          # lane-dense output stores
        tn = N_pad
    else:
        tn = tile_n
        N_pad = _round_up(N, tn)

    if K <= tile_k:
        K_pad = _round_up(K, 128)
        tk = K_pad
    else:
        tk = tile_k
        K_pad = _round_up(K, tk)

    # Zero padding is exact: zero K columns/rows contribute 0 to the dot,
    # padded M rows / N columns are sliced off below.
    x_p = x2d if (M_pad, K_pad) == (M, K) else jnp.pad(
        x2d, ((0, M_pad - M), (0, K_pad - K)))
    w_p = w if (K_pad, N_pad) == (K, N) else jnp.pad(
        w, ((0, K_pad - K), (0, N_pad - N)))
    b_p = (b if N_pad == N else jnp.pad(b, (0, N_pad - N))).reshape(1, N_pad)

    grid = (M_pad // tm, N_pad // tn, K_pad // tk)

    # Scoped VMEM budget: double-buffered x / w / out tiles + f32 acc + bias.
    vmem_bytes = (2 * (tm * tk + tk * tn + tm * tn) * itemsize
                  + tm * tn * 4 + 2 * tn * itemsize)
    vmem_limit = int(min(max(vmem_bytes + (4 << 20), 32 << 20), 64 << 20))

    cost = pl.CostEstimate(
        flops=2 * M_pad * K_pad * N_pad,
        transcendentals=0,
        bytes_accessed=(M_pad * K_pad + K_pad * N_pad
                        + M_pad * N_pad + N_pad) * itemsize,
    )

    y_p = pl.pallas_call(
        _td_linear_kernel,
        out_shape=jax.ShapeDtypeStruct((M_pad, N_pad), dtype),
        grid_spec=pltpu.PrefetchScalarGridSpec(
            num_scalar_prefetch=0,
            grid=grid,
            in_specs=[
                pl.BlockSpec((tm, tk), lambda i, j, k: (i, k)),   # x tile
                pl.BlockSpec((tk, tn), lambda i, j, k: (k, j)),   # weight tile
                pl.BlockSpec((1, tn), lambda i, j, k: (0, j)),    # bias row
            ],
            out_specs=pl.BlockSpec((tm, tn), lambda i, j, k: (i, j)),
            scratch_shapes=[pltpu.VMEM((tm, tn), jnp.float32)],
        ),
        compiler_params=pltpu.CompilerParams(
            dimension_semantics=("parallel", "parallel", "arbitrary"),
            vmem_limit_bytes=vmem_limit,
        ),
        cost_estimate=cost,
    )(x_p, w_p, b_p)

    if (M_pad, N_pad) != (M, N):
        y_p = y_p[:M, :N]
    return y_p


# ----------------------------------------------------------------------------
# TimeDistributed wrapper (JAX glue mirroring the PyTorch forward exactly).
# ----------------------------------------------------------------------------
def time_distributed_linear(x0, w, b, *, batch_first=True):
    """Semantics of TimeDistributed(nn.Linear(K, N), batch_first=batch_first)."""
    if x0.ndim <= 2:
        # <= 2-D input: apply the module directly (no reshaping).
        x2d = x0 if x0.ndim == 2 else x0.reshape(1, -1)
        y = _linear_pallas(x2d, w, b)
        return y if x0.ndim == 2 else y.reshape(-1)

    # x_reshape = x0.contiguous().view(-1, x0.size(-1))
    K = x0.shape[-1]
    x2d = x0.reshape(-1, K)

    y = _linear_pallas(x2d, w, b)                 # (prod(lead), N)
    N = y.shape[-1]

    if batch_first:
        # y.view(x0.size(0), -1, y.size(-1))
        return y.reshape(x0.shape[0], -1, N)
    else:
        # y.view(-1, x0.size(1), y.size(-1))
        return y.reshape(-1, x0.shape[1], N)

    # TODO(synk): the PyTorch class can also wrap nn.Embedding (int64 cast +
    # table lookup); only the Linear instantiation is implemented here.


# ----------------------------------------------------------------------------
# Demo / self-test
# ----------------------------------------------------------------------------
if __name__ == "__main__":
    key = jax.random.PRNGKey(0)
    k_x, k_w, k_b = jax.random.split(key, 3)

    B, T = 2, 8           # batch, sequence length
    K_IN, N_OUT = 32, 64  # wrapped nn.Linear(32, 64)

    x = jax.random.normal(k_x, (B, T, K_IN), dtype=jnp.float32)
    # Deterministic "nn.Linear"-like init (uniform in +-1/sqrt(K_IN)).
    bound = 1.0 / (K_IN ** 0.5)
    w = jax.random.uniform(k_w, (K_IN, N_OUT), jnp.float32, -bound, bound)
    b = jax.random.uniform(k_b, (N_OUT,), jnp.float32, -bound, bound)

    y = time_distributed_linear(x, w, b, batch_first=True)
    y = jax.block_until_ready(y)

    # Reference (plain JAX) for the TimeDistributed(Linear) semantics.
    y_ref = (x.reshape(-1, K_IN) @ w + b).reshape(B, -1, N_OUT)
    assert y.shape == (B, T, N_OUT), y.shape
    assert jnp.allclose(y, y_ref, atol=1e-4, rtol=1e-4), float(
        jnp.max(jnp.abs(y - y_ref)))

    print("KERNEL_OK")
</pallas_src>

<mosaic_0001>
module attributes {stable_mosaic.version = 11 : i64} {
  func.func @_td_linear_kernel(%arg0: i32, %arg1: i32, %arg2: i32, %arg3: memref<16x128xf32, #tpu.memory_space<vmem>>, %arg4: memref<128x128xf32, #tpu.memory_space<vmem>>, %arg5: memref<1x128xf32, #tpu.memory_space<vmem>>, %arg6: memref<16x128xf32, #tpu.memory_space<vmem>>, %arg7: memref<16x128xf32, #tpu.memory_space<vmem>>) attributes {dimension_semantics = [#tpu.dimension_semantics<parallel>, #tpu.dimension_semantics<parallel>, #tpu.dimension_semantics<arbitrary>], iteration_bounds = array<i64: 1, 1, 1>, scalar_prefetch = 0 : i64, scratch_operands = 1 : i64, tpu.core_type = #tpu.core_type<tc>, window_params = [{transform_indices = @transform_0, window_bounds = array<i64: 16, 128>}, {transform_indices = @transform_1, window_bounds = array<i64: 128, 128>}, {transform_indices = @transform_2, window_bounds = array<i64: 1, 128>}, {transform_indices = @transform_3, window_bounds = array<i64: 16, 128>}]} {
    %c0_i32 = arith.constant 0 : i32
    %0 = arith.cmpi eq, %arg2, %c0_i32 : i32
    %1 = arith.extui %0 : i1 to i32
    %c0_i32_0 = arith.constant 0 : i32
    %2 = arith.cmpi ne, %1, %c0_i32_0 : i32
    scf.if %2 {
      %cst_10 = arith.constant 0.000000e+00 : f32
      %12 = vector.broadcast %cst_10 : f32 to vector<16x128xf32>
      %c0_11 = arith.constant 0 : index
      %c0_12 = arith.constant 0 : index
      %13 = vector.load %arg7[%c0_11, %c0_12] : memref<16x128xf32, #tpu.memory_space<vmem>>, vector<16x128xf32>
      tpu.vector_store %arg7[%c0_11, %c0_12], %12 {strides = array<i32>} : memref<16x128xf32, #tpu.memory_space<vmem>>, vector<16x128xf32>,
    } else {
    }
    %c0 = arith.constant 0 : index
    %c0_1 = arith.constant 0 : index
    %3 = vector.load %arg7[%c0, %c0_1] : memref<16x128xf32, #tpu.memory_space<vmem>>, vector<16x128xf32>
    %c0_2 = arith.constant 0 : index
    %c0_3 = arith.constant 0 : index
    %4 = vector.load %arg3[%c0_2, %c0_3] : memref<16x128xf32, #tpu.memory_space<vmem>>, vector<16x128xf32>
    %c0_4 = arith.constant 0 : index
    %c0_5 = arith.constant 0 : index
    %5 = vector.load %arg4[%c0_4, %c0_5] : memref<128x128xf32, #tpu.memory_space<vmem>>, vector<128x128xf32>
    %cst = arith.constant dense<0.000000e+00> : vector<16x128xf32>
    %6 = tpu.matmul %4, %5, %cst {dimension_numbers = #tpu.dot_dimension_numbers<[1], [0], [0], [1], [0, 0, 1, 1], [], []>} : vector<16x128xf32>, vector<128x128xf32>, vector<16x128xf32> -> vector<16x128xf32>
    %7 = arith.addf %3, %6 : vector<16x128xf32>
    %c0_6 = arith.constant 0 : index
    %c0_7 = arith.constant 0 : index
    %8 = vector.load %arg7[%c0_6, %c0_7] : memref<16x128xf32, #tpu.memory_space<vmem>>, vector<16x128xf32>
    tpu.vector_store %arg7[%c0_6, %c0_7], %7 {strides = array<i32>} : memref<16x128xf32, #tpu.memory_space<vmem>>, vector<16x128xf32>,
    %c0_i32_8 = arith.constant 0 : i32
    %9 = arith.cmpi eq, %arg2, %c0_i32_8 : i32
    %10 = arith.extui %9 : i1 to i32
    %c0_i32_9 = arith.constant 0 : i32
    %11 = arith.cmpi ne, %10, %c0_i32_9 : i32
    scf.if %11 {
      %c0_10 = arith.constant 0 : index
      %c0_11 = arith.constant 0 : index
      %12 = vector.load %arg7[%c0_10, %c0_11] : memref<16x128xf32, #tpu.memory_space<vmem>>, vector<16x128xf32>
      %c0_12 = arith.constant 0 : index
      %c0_13 = arith.constant 0 : index
      %13 = vector.load %arg5[%c0_12, %c0_13] : memref<1x128xf32, #tpu.memory_space<vmem>>, vector<1x128xf32>
      %14 = vector.broadcast %13 : vector<1x128xf32> to vector<16x128xf32>
      %15 = arith.addf %12, %14 : vector<16x128xf32>
      %c0_14 = arith.constant 0 : index
      %c0_15 = arith.constant 0 : index
      %16 = vector.load %arg6[%c0_14, %c0_15] : memref<16x128xf32, #tpu.memory_space<vmem>>, vector<16x128xf32>
      tpu.vector_store %arg6[%c0_14, %c0_15], %15 {strides = array<i32>} : memref<16x128xf32, #tpu.memory_space<vmem>>, vector<16x128xf32>,
    } else {
    }
    return
  }
  func.func @transform_0(%arg0: i32, %arg1: i32, %arg2: i32) -> (i32, i32) {
    %c0_i32 = arith.constant 0 : i32
    return %arg0, %arg2 : i32, i32
  }
  func.func @transform_1(%arg0: i32, %arg1: i32, %arg2: i32) -> (i32, i32) {
    %c0_i32 = arith.constant 0 : i32
    return %arg2, %arg1 : i32, i32
  }
  func.func @transform_2(%arg0: i32, %arg1: i32, %arg2: i32) -> (i32, i32) {
    %c0_i32 = arith.constant 0 : i32
    %c0_i32_0 = arith.constant 0 : i32
    return %c0_i32, %arg1 : i32, i32
  }
  func.func @transform_3(%arg0: i32, %arg1: i32, %arg2: i32) -> (i32, i32) {
    %c0_i32 = arith.constant 0 : i32
    return %arg0, %arg1 : i32, i32
  }
}

</mosaic_0001>

<llo_original>
// kernel: tpu_custom_call.1
$region0: #{tpu_custom_call.1}
  #allocation0 [shape = 'u32[]', space=smem, size = 0x4, offset = 0x4, fixed_abs, tag = 'smem constant byte address 0x4 - core index']
  #allocation1 [shape = 'u32[72,128]{1,0:T(1,128)}', space=vmem, size = 0x9000, scoped, tag = 'internal scratch']
  #allocation2 [shape = 'f32[16,128]{1,0:T(8,128)}', space=vmem, size = 0x2000, scoped, tag = 'scratch operand']
  %s0 = inlined_call_operand.hbm [shape: f32[16,128], index: 0, kind: input, shape index: {}]
  %s1 = inlined_call_operand.hbm [shape: f32[128,128], index: 1, kind: input, shape index: {}]
  %s2 = inlined_call_operand.vmem [shape: f32[1,128], index: 2, kind: input, shape index: {}]
  %s3 = inlined_call_operand.hbm [shape: f32[16,128], index: 3, kind: output, shape index: {}]
  %s4 = sld [smem:[#allocation0]]
  $region38: #{tpu_custom_call.1} parent=0
    _
  %s6 = ssub.s32 1, %s4
  %s7 = scalar_select 0, %s6, %s4
  $region1: #{tpu_custom_call.1} parent=0
    #allocation3 [shape = 'u8[8192]{0}', space=vmem, size = 0x2000, scoped, tag = 'input window, operand 0, single buffered']
    #allocation4 [shape = 's32[1]{0}', space=sflag, size = 0x4, scoped, tag = 'scoped memory for tpu_custom_call.1']
    #allocation5 [shape = 's32[1]{0}', space=sflag, size = 0x4, scoped, tag = 'scoped memory for tpu_custom_call.1']
    #allocation6 [shape = 'u8[65536]{0}', space=vmem, size = 0x10000, scoped, tag = 'input window, operand 1, single buffered']
    #allocation7 [shape = 's32[1]{0}', space=sflag, size = 0x4, scoped, tag = 'scoped memory for tpu_custom_call.1']
    #allocation8 [shape = 'u8[8192]{0}', space=vmem, size = 0x2000, scoped, tag = 'output window, operand 0, single buffered']
    %8 = vsyncpa [#allocation4], 0
    %9 = vsyncpa [#allocation7], 0
    %10 = vsyncpa [#allocation5], 0
    // Predicated region
    $region2: #{tpu_custom_call.1} parent=1 // pred_check
      _
    $region3: #{tpu_custom_call.1} parent=1 // pred_check_branch
      %12 = sbr.rel (0) target = $region5
    $region4: #{tpu_custom_call.1} parent=1 // pred_region
      %14 = vsyncadd [#allocation4], 0
      %s15 = sshll.u32 %s0, 4
      %s16 = int_to_ptr.hbm [resolvable:$true] %s15
      %s17 = sshll.u32 [#allocation3], 4
      %s18 = int_to_ptr.vmem [resolvable:$true] %s17
      %23 = dma.hbm_to_vmem [thread:$0]  %s16, 256, %s18, [#allocation4], 128, 128, 8
    $region5: #{tpu_custom_call.1} parent=1 // pred_fallthru
      _
    // Predicated region
    $region6: #{tpu_custom_call.1} parent=1 // pred_check
      _
    $region7: #{tpu_custom_call.1} parent=1 // pred_check_branch
      %25 = sbr.rel (0) target = $region9
    $region8: #{tpu_custom_call.1} parent=1 // pred_region
      %27 = vsyncadd [#allocation7], 0
      %s28 = sshll.u32 %s1, 4
      %s29 = int_to_ptr.hbm [resolvable:$true] %s28
      %s30 = sshll.u32 [#allocation6], 4
      %s31 = int_to_ptr.vmem [resolvable:$true] %s30
      %36 = dma.hbm_to_vmem [thread:$0]  %s29, 2048, %s31, [#allocation7], 128, 128, 8
    $region9: #{tpu_custom_call.1} parent=1 // pred_fallthru
      _
    // Predicated region
    $region10: #{tpu_custom_call.1} parent=1 // pred_check
      _
    $region11: #{tpu_custom_call.1} parent=1 // pred_check_branch
      %38 = sbr.rel (0) target = $region13
    $region12: #{tpu_custom_call.1} parent=1 // pred_region
      _
    $region13: #{tpu_custom_call.1} parent=1 // pred_fallthru
      _
    // Predicated region
    $region14: #{tpu_custom_call.1} parent=1 // pred_check
      _
    $region15: #{tpu_custom_call.1} parent=1 // pred_check_branch
      %40 = sbr.rel (0) target = $region17
    $region16: #{tpu_custom_call.1} parent=1 // pred_region
      %42 = dma.done [#allocation4], 256
    $region17: #{tpu_custom_call.1} parent=1 // pred_fallthru
      _
    // Predicated region
    $region18: #{tpu_custom_call.1} parent=1 // pred_check
      _
    $region19: #{tpu_custom_call.1} parent=1 // pred_check_branch
      %44 = sbr.rel (0) target = $region21
    $region20: #{tpu_custom_call.1} parent=1 // pred_region
      %46 = dma.done [#allocation7], 2048
    $region21: #{tpu_custom_call.1} parent=1 // pred_fallthru
      _
    %p47 = scmp.eq.s32.totalorder 0, 0
    // Predicated region
    $region22: #{tpu_custom_call.1} parent=1 // pred_check
      %p48 = pneg %p47
    $region23: #{tpu_custom_call.1} parent=1 // pred_check_branch
      %50 = sbr.rel (%p48) target = $region25
    $region24: #{tpu_custom_call.1} parent=1 // pred_region
      %51 = vst [vmem:[#allocation2] sm:$0xff] 0.0
      %52 = vst [vmem:[#allocation2 + $0x8] sm:$0xff] 0.0
    $region25: #{tpu_custom_call.1} parent=1 // pred_fallthru
      _
    %v53 = vld [vmem:[#allocation2] sm:$0xff]
    %v54 = vld [vmem:[#allocation2 + $0x8] sm:$0xff]
    %v55 = vld [vmem:[#allocation3] sm:$0xff]
    %v56 = vld [vmem:[#allocation3 + $0x8] sm:$0xff]
    %v57 = vld [vmem:[#allocation6] sm:$0xff]
    %v58 = vld [vmem:[#allocation6 + $0x8] sm:$0xff]
    %v59 = vld [vmem:[#allocation6 + $0x10] sm:$0xff]
    %v60 = vld [vmem:[#allocation6 + $0x18] sm:$0xff]
    %v61 = vld [vmem:[#allocation6 + $0x20] sm:$0xff]
    %v62 = vld [vmem:[#allocation6 + $0x28] sm:$0xff]
    %v63 = vld [vmem:[#allocation6 + $0x30] sm:$0xff]
    %v64 = vld [vmem:[#allocation6 + $0x38] sm:$0xff]
    %v65 = vld [vmem:[#allocation6 + $0x40] sm:$0xff]
    %v66 = vld [vmem:[#allocation6 + $0x48] sm:$0xff]
    %v67 = vld [vmem:[#allocation6 + $0x50] sm:$0xff]
    %v68 = vld [vmem:[#allocation6 + $0x58] sm:$0xff]
    %v69 = vld [vmem:[#allocation6 + $0x60] sm:$0xff]
    %v70 = vld [vmem:[#allocation6 + $0x68] sm:$0xff]
    %v71 = vld [vmem:[#allocation6 + $0x70] sm:$0xff]
    %v72 = vld [vmem:[#allocation6 + $0x78] sm:$0xff]
    %73 = vmatpush.msra.mxu0 %v72
    %74 = vmatpush.msra.mxu0 %v71
    %75 = vmatpush.msra.mxu0 %v70
    %76 = vmatpush.msra.mxu0 %v69
    %77 = vmatpush.msra.mxu0 %v68
    %78 = vmatpush.msra.mxu0 %v67
    %79 = vmatpush.msra.mxu0 %v66
    %80 = vmatpush.msra.mxu0 %v65
    %81 = vmatpush.msra.mxu0 %v64
    %82 = vmatpush.msra.mxu0 %v63
    %83 = vmatpush.msra.mxu0 %v62
    %84 = vmatpush.msra.mxu0 %v61
    %85 = vmatpush.msra.mxu0 %v60
    %86 = vmatpush.msra.mxu0 %v59
    %87 = vmatpush.msra.mxu0 %v58
    %88 = vmatpush.msra.mxu0 %v57
    %89 = vmatmul.f32.gmra.mxu0 %v55
    %v90 = vpop.f32.mrf.mxu0
    %v91 = vadd.f32 0.0, %v90
    %92 = vmatmul.f32.gmra.mxu0 %v56
    %v93 = vpop.f32.mrf.mxu0
    %v94 = vadd.f32 0.0, %v93
    %95 = vdwg.mxu0
    %v96 = vadd.f32 %v53, %v91
    %v97 = vadd.f32 %v54, %v94
    %98 = vst [vmem:[#allocation2] sm:$0xff] %v96
    %99 = vst [vmem:[#allocation2 + $0x8] sm:$0xff] %v97
    // Predicated region
    $region26: #{tpu_custom_call.1} parent=1 // pred_check
      %p100 = pneg %p47
    $region27: #{tpu_custom_call.1} parent=1 // pred_check_branch
      %102 = sbr.rel (%p100) target = $region29
    $region28: #{tpu_custom_call.1} parent=1 // pred_region
      %v103 = vld [vmem:[#allocation2] sm:$0xff]
      %v104 = vld [vmem:[#allocation2 + $0x8] sm:$0xff]
      %v105 = vld [vmem:[%s2] sm:$0x1]
      %v107 = vperm.slane %v105, 0
      %v109 = vadd.f32 %v103, %v107
      %v110 = vadd.f32 %v104, %v107
      %111 = vst [vmem:[#allocation8] sm:$0xff] %v109
      %112 = vst [vmem:[#allocation8 + $0x8] sm:$0xff] %v110
    $region29: #{tpu_custom_call.1} parent=1 // pred_fallthru
      _
    // Predicated region
    $region30: #{tpu_custom_call.1} parent=1 // pred_check
      _
    $region31: #{tpu_custom_call.1} parent=1 // pred_check_branch
      %114 = sbr.rel (0) target = $region33
    $region32: #{tpu_custom_call.1} parent=1 // pred_region
      %116 = vsyncadd [#allocation5], 0
      %s117 = sshll.u32 [#allocation8], 4
      %s118 = int_to_ptr.vmem [resolvable:$true] %s117
      %s119 = sshll.u32 %s3, 4
      %s120 = int_to_ptr.hbm [resolvable:$true] %s119
      %125 = dma.vmem_to_hbm [thread:$0]  %s118, 256, %s120, [#allocation5], 128, 128, 8
    $region33: #{tpu_custom_call.1} parent=1 // pred_fallthru
      _
    // Predicated region
    $region34: #{tpu_custom_call.1} parent=1 // pred_check
      _
    $region35: #{tpu_custom_call.1} parent=1 // pred_check_branch
      %127 = sbr.rel (0) target = $region37
    $region36: #{tpu_custom_call.1} parent=1 // pred_region
      %129 = dma.done [#allocation5], 256
    $region37: #{tpu_custom_call.1} parent=1 // pred_fallthru
      _
    %130 = vsyncpa [#allocation4], 1
    %131 = vsyncpa [#allocation7], 1
    %132 = vsyncpa [#allocation5], 1

</llo_original>
